<compile_context>
chip_gen: v7x
topology: tpu7x:2x2x1
jax: 0.10.0
libtpu: 0.0.40
codegen_flags: <defaults>
</compile_context>

<pallas_src>
import functools

import jax
import jax.numpy as jnp
from jax import lax
from jax.experimental import pallas as pl
from jax.experimental.pallas import tpu as pltpu


# ----------------------------- Pallas kernel --------------------------------
def _add_colored_noise_kernel(audio_ref, noise_ref, inv_gain_ref, out_ref, *,
                              t_true, n_pad):
    audio = audio_ref[...]          # (block_b, T_pad) f32
    noise = noise_ref[...]          # (block_b, T_pad) f32 (padded cols are zeros)
    inv_gain = inv_gain_ref[...]    # (block_b, 1)     f32  == 10^(-snr_db/20)

    inv_t = jnp.float32(1.0 / t_true)

    # --- normalize noise per example: (n - mean) / unbiased std --------------
    # Padded columns are zero, so raw sums over the padded width equal the sums
    # over the true T samples. Each padded column contributes (0 - mean)^2 to the
    # centered-square sum, which we subtract exactly (n_pad is a static constant).
    mean = jnp.sum(noise, axis=-1, keepdims=True) * inv_t
    centered = noise - mean
    sum_c2 = jnp.sum(centered * centered, axis=-1, keepdims=True)
    sum_c2 = sum_c2 - jnp.float32(n_pad) * mean * mean
    var = sum_c2 * jnp.float32(1.0 / (t_true - 1))
    # tiny guard: keeps padded / degenerate rows finite (real noise var >> 1e-30)
    noise_n = centered * lax.rsqrt(jnp.maximum(var, jnp.float32(1e-30)))

    # --- per-example RMS of the clean audio ----------------------------------
    rms = jnp.sqrt(jnp.sum(audio * audio, axis=-1, keepdims=True) * inv_t)

    # --- SNR-based gain + mix -------------------------------------------------
    out_ref[...] = audio + (rms * inv_gain) * noise_n


def add_colored_noise_pallas(audio, colored_noise, snr_db, *,
                             target_block_bytes=4 << 20):
    """audio: (B, T) f32, colored_noise: (B, T) f32 (un-normalized), snr_db: (B,)."""
    B, T = audio.shape

    # ---- TPU-friendly padding & block sizing --------------------------------
    T_pad = pl.cdiv(T, 128) * 128                       # lane-dense minor dim
    B8 = pl.cdiv(B, 8) * 8                              # full-sublane rows
    max_block_b = max(8, (target_block_bytes // (T_pad * 4)) // 8 * 8)
    block_b = min(max_block_b, B8)
    B_pad = pl.cdiv(B8, block_b) * block_b              # grid divides evenly
    grid = (B_pad // block_b,)

    def pad2(x):
        return jnp.pad(x.astype(jnp.float32), ((0, B_pad - B), (0, T_pad - T)))

    audio_p = pad2(audio)
    noise_p = pad2(colored_noise)
    inv_gain = jnp.exp(-snr_db.astype(jnp.float32) * (jnp.log(10.0) / 20.0))
    inv_gain = jnp.pad(inv_gain, (0, B_pad - B)).reshape(B_pad, 1)

    # 3 streams (audio in, noise in, out) x 2 pipeline buffers, plus slack.
    block_bytes = block_b * T_pad * 4
    vmem_limit = int(max(32 << 20, 6 * block_bytes + (4 << 20)))

    kernel = functools.partial(_add_colored_noise_kernel,
                               t_true=T, n_pad=T_pad - T)

    # TODO(synk): for extremely long clips where even an (8, T) block exceeds
    # VMEM (esp. v7x, 64 MiB), restructure into a T-tiled reduce pass + apply
    # pass; here T is kept whole per block so per-example stats stay exact.
    out = pl.pallas_call(
        kernel,
        grid=grid,
        out_shape=jax.ShapeDtypeStruct((B_pad, T_pad), jnp.float32),
        in_specs=[
            pl.BlockSpec((block_b, T_pad), lambda i: (i, 0)),
            pl.BlockSpec((block_b, T_pad), lambda i: (i, 0)),
            pl.BlockSpec((block_b, 1), lambda i: (i, 0)),
        ],
        out_specs=pl.BlockSpec((block_b, T_pad), lambda i: (i, 0)),
        input_output_aliases={0: 0},
        compiler_params=pltpu.CompilerParams(
            dimension_semantics=("parallel",),
            vmem_limit_bytes=vmem_limit),
    )(audio_p, noise_p, inv_gain)
    return out[:B, :T]


# ------------------------- plain-JAX glue (no hot path) ----------------------
def _gen_colored_noise_batch(key, f_decay, num_samples, sample_rate):
    """Spectrally shaped noise for the whole batch with ONE batched rfft/irfft.
    Matches torch_audiomentations._gen_noise; normalization happens in-kernel."""
    B = f_decay.shape[0]
    white = jax.random.normal(key, (B, num_samples), dtype=jnp.float32)
    spec = jnp.fft.rfft(white, axis=-1)                         # (B, F) complex
    freqs = jnp.linspace(1.0, (sample_rate / 2.0) ** 0.5, spec.shape[-1],
                         dtype=jnp.float32)
    # 1 / freqs**f_decay  ==  exp(-f_decay * log(freqs)), per example
    mask = jnp.exp(-f_decay[:, None].astype(jnp.float32) * jnp.log(freqs)[None, :])
    return jnp.fft.irfft(spec * mask, n=num_samples, axis=-1).astype(jnp.float32)


def add_colored_noise(audio, key, *, sample_rate=16000,
                      min_snr_in_db=3.0, max_snr_in_db=30.0,
                      min_f_decay=-2.0, max_f_decay=2.0):
    """Forward pass of AddColoredNoise: audio (B, T) -> noisy audio (B, T)."""
    B, T = audio.shape
    k_snr, k_decay, k_noise = jax.random.split(key, 3)
    snr_db = jax.random.uniform(k_snr, (B,), minval=min_snr_in_db,
                                maxval=max_snr_in_db, dtype=jnp.float32)
    f_decay = jax.random.uniform(k_decay, (B,), minval=min_f_decay,
                                 maxval=max_f_decay, dtype=jnp.float32)
    colored = _gen_colored_noise_batch(k_noise, f_decay, T, sample_rate)
    return add_colored_noise_pallas(audio, colored, snr_db)


# TODO(synk): per-example apply-probability p (Bernoulli gating, default 0.5 in
# torch_audiomentations) is not modeled; the transform is always applied.

if __name__ == "__main__":
    B, T = 4, 2048
    key = jax.random.PRNGKey(0)
    k_audio, k_tf = jax.random.split(key)
    audio = jax.random.normal(k_audio, (B, T), dtype=jnp.float32) * 0.1

    # --- correctness check of the Pallas hot path against plain JAX ----------
    k_snr, k_decay, k_noise = jax.random.split(k_tf, 3)
    snr_db = jax.random.uniform(k_snr, (B,), minval=3.0, maxval=30.0,
                                dtype=jnp.float32)
    f_decay = jax.random.uniform(k_decay, (B,), minval=-2.0, maxval=2.0,
                                 dtype=jnp.float32)
    colored = _gen_colored_noise_batch(k_noise, f_decay, T, 16000)

    def ref(a, n, snr):
        mu = n.mean(-1, keepdims=True)
        c = n - mu
        std = jnp.sqrt((c * c).sum(-1, keepdims=True) / (n.shape[-1] - 1))
        rms = jnp.sqrt((a * a).mean(-1, keepdims=True))
        scale = rms * 10.0 ** (-snr[:, None] / 20.0)
        return a + scale * (c / std)

    out_k = add_colored_noise_pallas(audio, colored, snr_db)
    out_r = ref(audio, colored, snr_db)
    jax.block_until_ready((out_k, out_r))
    assert out_k.shape == (B, T) and out_k.dtype == jnp.float32
    assert bool(jnp.all(jnp.isfinite(out_k)))
    assert bool(jnp.allclose(out_k, out_r, rtol=1e-4, atol=1e-5))

    # --- full forward pass (random snr / f_decay / noise) --------------------
    out = add_colored_noise(audio, k_tf)
    jax.block_until_ready(out)
    assert out.shape == (B, T) and out.dtype == jnp.float32
    assert bool(jnp.all(jnp.isfinite(out)))
    print("KERNEL_OK")
</pallas_src>

<mosaic_0001>
module attributes {stable_mosaic.version = 11 : i64} {
  func.func @_add_colored_noise_kernel(%arg0: i32, %arg1: memref<8x2048xf32, #tpu.memory_space<vmem>>, %arg2: memref<8x2048xf32, #tpu.memory_space<vmem>>, %arg3: memref<8x1xf32, #tpu.memory_space<vmem>>, %arg4: memref<8x2048xf32, #tpu.memory_space<vmem>>) attributes {dimension_semantics = [#tpu.dimension_semantics<parallel>], iteration_bounds = array<i64: 1>, scalar_prefetch = 0 : i64, scratch_operands = 0 : i64, tpu.core_type = #tpu.core_type<tc>, window_params = [{transform_indices = @transform_0, window_bounds = array<i64: 8, 2048>}, {transform_indices = @transform_1, window_bounds = array<i64: 8, 2048>}, {transform_indices = @transform_2, window_bounds = array<i64: 8, 1>}, {transform_indices = @transform_3, window_bounds = array<i64: 8, 2048>}]} {
    %c0 = arith.constant 0 : index
    %c0_0 = arith.constant 0 : index
    %0 = vector.load %arg1[%c0, %c0_0] : memref<8x2048xf32, #tpu.memory_space<vmem>>, vector<8x2048xf32>
    %c0_1 = arith.constant 0 : index
    %c0_2 = arith.constant 0 : index
    %1 = vector.load %arg2[%c0_1, %c0_2] : memref<8x2048xf32, #tpu.memory_space<vmem>>, vector<8x2048xf32>
    %c0_3 = arith.constant 0 : index
    %c0_4 = arith.constant 0 : index
    %2 = vector.load %arg3[%c0_3, %c0_4] : memref<8x1xf32, #tpu.memory_space<vmem>>, vector<8x1xf32>
    %cst = arith.constant dense<0.000000e+00> : vector<8xf32>
    %3 = vector.multi_reduction <add>, %1, %cst [1] : vector<8x2048xf32> to vector<8xf32>
    %4 = vector.shape_cast %3 : vector<8xf32> to vector<8x1xf32>
    %cst_5 = arith.constant 4.8828125E-4 : f32
    %5 = vector.broadcast %cst_5 : f32 to vector<8x1xf32>
    %6 = arith.mulf %4, %5 : vector<8x1xf32>
    %7 = vector.broadcast %6 : vector<8x1xf32> to vector<8x2048xf32>
    %8 = arith.subf %1, %7 : vector<8x2048xf32>
    %9 = arith.mulf %8, %8 : vector<8x2048xf32>
    %cst_6 = arith.constant dense<0.000000e+00> : vector<8xf32>
    %10 = vector.multi_reduction <add>, %9, %cst_6 [1] : vector<8x2048xf32> to vector<8xf32>
    %11 = vector.shape_cast %10 : vector<8xf32> to vector<8x1xf32>
    %cst_7 = arith.constant 0.000000e+00 : f32
    %12 = vector.broadcast %cst_7 : f32 to vector<8x1xf32>
    %13 = arith.mulf %12, %6 : vector<8x1xf32>
    %14 = arith.mulf %13, %6 : vector<8x1xf32>
    %15 = arith.subf %11, %14 : vector<8x1xf32>
    %cst_8 = arith.constant 4.88519785E-4 : f32
    %16 = vector.broadcast %cst_8 : f32 to vector<8x1xf32>
    %17 = arith.mulf %15, %16 : vector<8x1xf32>
    %cst_9 = arith.constant 1.000000e-30 : f32
    %18 = vector.broadcast %cst_9 : f32 to vector<8x1xf32>
    %19 = arith.maximumf %17, %18 : vector<8x1xf32>
    %20 = math.rsqrt %19 : vector<8x1xf32>
    %21 = vector.broadcast %20 : vector<8x1xf32> to vector<8x2048xf32>
    %22 = arith.mulf %8, %21 : vector<8x2048xf32>
    %23 = arith.mulf %0, %0 : vector<8x2048xf32>
    %cst_10 = arith.constant dense<0.000000e+00> : vector<8xf32>
    %24 = vector.multi_reduction <add>, %23, %cst_10 [1] : vector<8x2048xf32> to vector<8xf32>
    %25 = vector.shape_cast %24 : vector<8xf32> to vector<8x1xf32>
    %cst_11 = arith.constant 4.8828125E-4 : f32
    %26 = vector.broadcast %cst_11 : f32 to vector<8x1xf32>
    %27 = arith.mulf %25, %26 : vector<8x1xf32>
    %28 = math.sqrt %27 : vector<8x1xf32>
    %29 = arith.mulf %28, %2 : vector<8x1xf32>
    %30 = vector.broadcast %29 : vector<8x1xf32> to vector<8x2048xf32>
    %31 = arith.mulf %30, %22 : vector<8x2048xf32>
    %32 = arith.addf %0, %31 : vector<8x2048xf32>
    %c0_12 = arith.constant 0 : index
    %c0_13 = arith.constant 0 : index
    %33 = vector.load %arg4[%c0_12, %c0_13] : memref<8x2048xf32, #tpu.memory_space<vmem>>, vector<8x2048xf32>
    tpu.vector_store %arg4[%c0_12, %c0_13], %32 {strides = array<i32>} : memref<8x2048xf32, #tpu.memory_space<vmem>>, vector<8x2048xf32>,
    return
  }
  func.func @transform_0(%arg0: i32) -> (i32, i32) {
    %c0_i32 = arith.constant 0 : i32
    %c0_i32_0 = arith.constant 0 : i32
    return %arg0, %c0_i32 : i32, i32
  }
  func.func @transform_1(%arg0: i32) -> (i32, i32) {
    %c0_i32 = arith.constant 0 : i32
    %c0_i32_0 = arith.constant 0 : i32
    return %arg0, %c0_i32 : i32, i32
  }
  func.func @transform_2(%arg0: i32) -> (i32, i32) {
    %c0_i32 = arith.constant 0 : i32
    %c0_i32_0 = arith.constant 0 : i32
    return %arg0, %c0_i32 : i32, i32
  }
  func.func @transform_3(%arg0: i32) -> (i32, i32) {
    %c0_i32 = arith.constant 0 : i32
    %c0_i32_0 = arith.constant 0 : i32
    return %arg0, %c0_i32 : i32, i32
  }
}

</mosaic_0001>

<llo_original>
// kernel: tpu_custom_call.1
$region0: #{tpu_custom_call.1}
  #allocation0 [shape = 'u32[]', space=smem, size = 0x4, offset = 0x4, fixed_abs, tag = 'smem constant byte address 0x4 - core index']
  #allocation1 [shape = 'u32[144,128]{1,0:T(1,128)}', space=vmem, size = 0x12000, scoped, tag = 'internal scratch']
  %s0 = inlined_call_operand.hbm [shape: f32[8,2048], index: 0, kind: input, shape index: {}, may-alias: {0,3}]
  %s1 = inlined_call_operand.vmem [shape: f32[8,2048], index: 1, kind: input, shape index: {}]
  %s2 = inlined_call_operand.vmem [shape: f32[8,1], index: 2, kind: input, shape index: {}]
  %s3 = inlined_call_operand.hbm [shape: f32[8,2048], index: 3, kind: output, shape index: {}, may-alias: {0,3}]
  %s4 = sld [smem:[#allocation0]]
  $region26: #{tpu_custom_call.1} parent=0
    _
  %s6 = ssub.s32 1, %s4
  %s7 = scalar_select 0, %s6, %s4
  $region1: #{tpu_custom_call.1} parent=0
    #allocation2 [shape = 'u8[65536]{0}', space=vmem, size = 0x10000, scoped, tag = 'input window, operand 0, single buffered']
    #allocation3 [shape = 's32[1]{0}', space=sflag, size = 0x4, scoped, tag = 'scoped memory for tpu_custom_call.1']
    #allocation4 [shape = 's32[1]{0}', space=sflag, size = 0x4, scoped, tag = 'scoped memory for tpu_custom_call.1']
    #allocation5 [shape = 'u8[65536]{0}', space=vmem, size = 0x10000, scoped, tag = 'output window, operand 0, single buffered']
    %8 = vsyncpa [#allocation3], 0
    %9 = vsyncpa [#allocation4], 0
    // Predicated region
    $region2: #{tpu_custom_call.1} parent=1 // pred_check
      _
    $region3: #{tpu_custom_call.1} parent=1 // pred_check_branch
      %11 = sbr.rel (0) target = $region5
    $region4: #{tpu_custom_call.1} parent=1 // pred_region
      %s13 = ssub.s32 2048, 2048
      %14 = vsyncadd [#allocation3], %s13
      %s16 = sshll.u32 [#allocation2], 4
      %s17 = int_to_ptr.vmem [resolvable:$true] %s16
      %19 = dma.hbm_to_vmem [thread:$0]  %s0, 2048, %s17, [#allocation3]
    $region5: #{tpu_custom_call.1} parent=1 // pred_fallthru
      _
    // Predicated region
    $region6: #{tpu_custom_call.1} parent=1 // pred_check
      _
    $region7: #{tpu_custom_call.1} parent=1 // pred_check_branch
      %21 = sbr.rel (0) target = $region9
    $region8: #{tpu_custom_call.1} parent=1 // pred_region
      _
    $region9: #{tpu_custom_call.1} parent=1 // pred_fallthru
      _
    // Predicated region
    $region10: #{tpu_custom_call.1} parent=1 // pred_check
      _
    $region11: #{tpu_custom_call.1} parent=1 // pred_check_branch
      %23 = sbr.rel (0) target = $region13
    $region12: #{tpu_custom_call.1} parent=1 // pred_region
      _
    $region13: #{tpu_custom_call.1} parent=1 // pred_fallthru
      _
    // Predicated region
    $region14: #{tpu_custom_call.1} parent=1 // pred_check
      _
    $region15: #{tpu_custom_call.1} parent=1 // pred_check_branch
      %25 = sbr.rel (0) target = $region17
    $region16: #{tpu_custom_call.1} parent=1 // pred_region
      %26 = dma.done [#allocation3], 2048
    $region17: #{tpu_custom_call.1} parent=1 // pred_fallthru
      _
    %v27 = vld [vmem:[#allocation2] sm:$0xff]
    %v28 = vld [vmem:[#allocation2 + $0x8] sm:$0xff]
    %v29 = vld [vmem:[#allocation2 + $0x10] sm:$0xff]
    %v30 = vld [vmem:[#allocation2 + $0x18] sm:$0xff]
    %v31 = vld [vmem:[#allocation2 + $0x20] sm:$0xff]
    %v32 = vld [vmem:[#allocation2 + $0x28] sm:$0xff]
    %v33 = vld [vmem:[#allocation2 + $0x30] sm:$0xff]
    %v34 = vld [vmem:[#allocation2 + $0x38] sm:$0xff]
    %v35 = vld [vmem:[#allocation2 + $0x40] sm:$0xff]
    %v36 = vld [vmem:[#allocation2 + $0x48] sm:$0xff]
    %v37 = vld [vmem:[#allocation2 + $0x50] sm:$0xff]
    %v38 = vld [vmem:[#allocation2 + $0x58] sm:$0xff]
    %v39 = vld [vmem:[#allocation2 + $0x60] sm:$0xff]
    %v40 = vld [vmem:[#allocation2 + $0x68] sm:$0xff]
    %v41 = vld [vmem:[#allocation2 + $0x70] sm:$0xff]
    %v42 = vld [vmem:[#allocation2 + $0x78] sm:$0xff]
    %v43 = vld [vmem:[%s1] sm:$0xff]
    %v44 = vld [vmem:[%s1 + $0x8] sm:$0xff]
    %v45 = vld [vmem:[%s1 + $0x10] sm:$0xff]
    %v46 = vld [vmem:[%s1 + $0x18] sm:$0xff]
    %v47 = vld [vmem:[%s1 + $0x20] sm:$0xff]
    %v48 = vld [vmem:[%s1 + $0x28] sm:$0xff]
    %v49 = vld [vmem:[%s1 + $0x30] sm:$0xff]
    %v50 = vld [vmem:[%s1 + $0x38] sm:$0xff]
    %v51 = vld [vmem:[%s1 + $0x40] sm:$0xff]
    %v52 = vld [vmem:[%s1 + $0x48] sm:$0xff]
    %v53 = vld [vmem:[%s1 + $0x50] sm:$0xff]
    %v54 = vld [vmem:[%s1 + $0x58] sm:$0xff]
    %v55 = vld [vmem:[%s1 + $0x60] sm:$0xff]
    %v56 = vld [vmem:[%s1 + $0x68] sm:$0xff]
    %v57 = vld [vmem:[%s1 + $0x70] sm:$0xff]
    %v58 = vld [vmem:[%s1 + $0x78] sm:$0xff]
    %v59 = vld [vmem:[%s2] sm:$0xff]
    %v60 = vadd.f32 %v43, %v44
    %v61 = vadd.f32 %v60, %v45
    %v62 = vadd.f32 %v61, %v46
    %v63 = vadd.f32 %v62, %v47
    %v64 = vadd.f32 %v63, %v48
    %v65 = vadd.f32 %v64, %v49
    %v66 = vadd.f32 %v65, %v50
    %v67 = vadd.f32 %v66, %v51
    %v68 = vadd.f32 %v67, %v52
    %v69 = vadd.f32 %v68, %v53
    %v70 = vadd.f32 %v69, %v54
    %v71 = vadd.f32 %v70, %v55
    %v72 = vadd.f32 %v71, %v56
    %v73 = vadd.f32 %v72, %v57
    %v74 = vadd.f32 %v73, %v58
    %75 = vadd.xlane.f32.xlu0 %v74
    %v76 = vpop.xlane.xlu0 %75
    %v77 = vmul.f32 %v76, 0.00048828125
    %v78 = vsub.f32 %v43, %v77
    %v79 = vsub.f32 %v44, %v77
    %v80 = vsub.f32 %v45, %v77
    %v81 = vsub.f32 %v46, %v77
    %v82 = vsub.f32 %v47, %v77
    %v83 = vsub.f32 %v48, %v77
    %v84 = vsub.f32 %v49, %v77
    %v85 = vsub.f32 %v50, %v77
    %v86 = vsub.f32 %v51, %v77
    %v87 = vsub.f32 %v52, %v77
    %v88 = vsub.f32 %v53, %v77
    %v89 = vsub.f32 %v54, %v77
    %v90 = vsub.f32 %v55, %v77
    %v91 = vsub.f32 %v56, %v77
    %v92 = vsub.f32 %v57, %v77
    %v93 = vsub.f32 %v58, %v77
    %v94 = vmul.f32 %v78, %v78
    %v95 = vmul.f32 %v79, %v79
    %v96 = vmul.f32 %v80, %v80
    %v97 = vmul.f32 %v81, %v81
    %v98 = vmul.f32 %v82, %v82
    %v99 = vmul.f32 %v83, %v83
    %v100 = vmul.f32 %v84, %v84
    %v101 = vmul.f32 %v85, %v85
    %v102 = vmul.f32 %v86, %v86
    %v103 = vmul.f32 %v87, %v87
    %v104 = vmul.f32 %v88, %v88
    %v105 = vmul.f32 %v89, %v89
    %v106 = vmul.f32 %v90, %v90
    %v107 = vmul.f32 %v91, %v91
    %v108 = vmul.f32 %v92, %v92
    %v109 = vmul.f32 %v93, %v93
    %v110 = vadd.f32 %v94, %v95
    %v111 = vadd.f32 %v110, %v96
    %v112 = vadd.f32 %v111, %v97
    %v113 = vadd.f32 %v112, %v98
    %v114 = vadd.f32 %v113, %v99
    %v115 = vadd.f32 %v114, %v100
    %v116 = vadd.f32 %v115, %v101
    %v117 = vadd.f32 %v116, %v102
    %v118 = vadd.f32 %v117, %v103
    %v119 = vadd.f32 %v118, %v104
    %v120 = vadd.f32 %v119, %v105
    %v121 = vadd.f32 %v120, %v106
    %v122 = vadd.f32 %v121, %v107
    %v123 = vadd.f32 %v122, %v108
    %v124 = vadd.f32 %v123, %v109
    %125 = vadd.xlane.f32.xlu0 %v124
    %v126 = vpop.xlane.xlu0 %125
    %v127 = vmul.f32 %v77, 0.0
    %v128 = vmul.f32 %v127, %v77
    %v129 = vsub.f32 %v126, %v128
    %v130 = vmul.f32 %v129, 0.0004885198
    %v131 = vmax.f32 %v130, 1e-30
    %v132 = vrsqrt.pop %v131
    %v133 = vmul.f32 %v78, %v132
    %v134 = vmul.f32 %v79, %v132
    %v135 = vmul.f32 %v80, %v132
    %v136 = vmul.f32 %v81, %v132
    %v137 = vmul.f32 %v82, %v132
    %v138 = vmul.f32 %v83, %v132
    %v139 = vmul.f32 %v84, %v132
    %v140 = vmul.f32 %v85, %v132
    %v141 = vmul.f32 %v86, %v132
    %v142 = vmul.f32 %v87, %v132
    %v143 = vmul.f32 %v88, %v132
    %v144 = vmul.f32 %v89, %v132
    %v145 = vmul.f32 %v90, %v132
    %v146 = vmul.f32 %v91, %v132
    %v147 = vmul.f32 %v92, %v132
    %v148 = vmul.f32 %v93, %v132
    %v149 = vmul.f32 %v27, %v27
    %v150 = vmul.f32 %v28, %v28
    %v151 = vmul.f32 %v29, %v29
    %v152 = vmul.f32 %v30, %v30
    %v153 = vmul.f32 %v31, %v31
    %v154 = vmul.f32 %v32, %v32
    %v155 = vmul.f32 %v33, %v33
    %v156 = vmul.f32 %v34, %v34
    %v157 = vmul.f32 %v35, %v35
    %v158 = vmul.f32 %v36, %v36
    %v159 = vmul.f32 %v37, %v37
    %v160 = vmul.f32 %v38, %v38
    %v161 = vmul.f32 %v39, %v39
    %v162 = vmul.f32 %v40, %v40
    %v163 = vmul.f32 %v41, %v41
    %v164 = vmul.f32 %v42, %v42
    %v165 = vadd.f32 %v149, %v150
    %v166 = vadd.f32 %v165, %v151
    %v167 = vadd.f32 %v166, %v152
    %v168 = vadd.f32 %v167, %v153
    %v169 = vadd.f32 %v168, %v154
    %v170 = vadd.f32 %v169, %v155
    %v171 = vadd.f32 %v170, %v156
    %v172 = vadd.f32 %v171, %v157
    %v173 = vadd.f32 %v172, %v158
    %v174 = vadd.f32 %v173, %v159
    %v175 = vadd.f32 %v174, %v160
    %v176 = vadd.f32 %v175, %v161
    %v177 = vadd.f32 %v176, %v162
    %v178 = vadd.f32 %v177, %v163
    %v179 = vadd.f32 %v178, %v164
    %180 = vadd.xlane.f32.xlu0 %v179
    %v181 = vpop.xlane.xlu0 %180
    %v182 = vmul.f32 %v181, 0.00048828125
    %v183 = vrsqrt.pop %v182
    %v184 = vmul.f32 %v182, %v183
    %vm185 = vcmp.eq.f32.partialorder %v182, inf
    %v186 = vsel %vm185, %v182, %v184
    %vm187 = vcmp.eq.f32.partialorder %v182, 0.0
    %v188 = vand.u32 %v182, 2147483648
    %v189 = vsel %vm187, %v188, %v186
    %v190 = vmul.f32 %v189, %v59
    %192 = vset.pattern.permute.xlu0 0
    %193 = vperm.xlu0 %192, %v190
    %v194 = vpop.permute.xlu0 %193
    %v196 = vmul.f32 %v194, %v133
    %v197 = vmul.f32 %v194, %v134
    %v198 = vmul.f32 %v194, %v135
    %v199 = vmul.f32 %v194, %v136
    %v200 = vmul.f32 %v194, %v137
    %v201 = vmul.f32 %v194, %v138
    %v202 = vmul.f32 %v194, %v139
    %v203 = vmul.f32 %v194, %v140
    %v204 = vmul.f32 %v194, %v141
    %v205 = vmul.f32 %v194, %v142
    %v206 = vmul.f32 %v194, %v143
    %v207 = vmul.f32 %v194, %v144
    %v208 = vmul.f32 %v194, %v145
    %v209 = vmul.f32 %v194, %v146
    %v210 = vmul.f32 %v194, %v147
    %v211 = vmul.f32 %v194, %v148
    %v212 = vadd.f32 %v27, %v196
    %v213 = vadd.f32 %v28, %v197
    %v214 = vadd.f32 %v29, %v198
    %v215 = vadd.f32 %v30, %v199
    %v216 = vadd.f32 %v31, %v200
    %v217 = vadd.f32 %v32, %v201
    %v218 = vadd.f32 %v33, %v202
    %v219 = vadd.f32 %v34, %v203
    %v220 = vadd.f32 %v35, %v204
    %v221 = vadd.f32 %v36, %v205
    %v222 = vadd.f32 %v37, %v206
    %v223 = vadd.f32 %v38, %v207
    %v224 = vadd.f32 %v39, %v208
    %v225 = vadd.f32 %v40, %v209
    %v226 = vadd.f32 %v41, %v210
    %v227 = vadd.f32 %v42, %v211
    %228 = vst [vmem:[#allocation5] sm:$0xff] %v212
    %229 = vst [vmem:[#allocation5 + $0x8] sm:$0xff] %v213
    %230 = vst [vmem:[#allocation5 + $0x10] sm:$0xff] %v214
    %231 = vst [vmem:[#allocation5 + $0x18] sm:$0xff] %v215
    %232 = vst [vmem:[#allocation5 + $0x20] sm:$0xff] %v216
    %233 = vst [vmem:[#allocation5 + $0x28] sm:$0xff] %v217
    %234 = vst [vmem:[#allocation5 + $0x30] sm:$0xff] %v218
    %235 = vst [vmem:[#allocation5 + $0x38] sm:$0xff] %v219
    %236 = vst [vmem:[#allocation5 + $0x40] sm:$0xff] %v220
    %237 = vst [vmem:[#allocation5 + $0x48] sm:$0xff] %v221
    %238 = vst [vmem:[#allocation5 + $0x50] sm:$0xff] %v222
    %239 = vst [vmem:[#allocation5 + $0x58] sm:$0xff] %v223
    %240 = vst [vmem:[#allocation5 + $0x60] sm:$0xff] %v224
    %241 = vst [vmem:[#allocation5 + $0x68] sm:$0xff] %v225
    %242 = vst [vmem:[#allocation5 + $0x70] sm:$0xff] %v226
    %243 = vst [vmem:[#allocation5 + $0x78] sm:$0xff] %v227
    // Predicated region
    $region18: #{tpu_custom_call.1} parent=1 // pred_check
      _
    $region19: #{tpu_custom_call.1} parent=1 // pred_check_branch
      %245 = sbr.rel (0) target = $region21
    $region20: #{tpu_custom_call.1} parent=1 // pred_region
      %s247 = ssub.s32 2048, 2048
      %248 = vsyncadd [#allocation4], %s247
      %s250 = sshll.u32 [#allocation5], 4
      %s251 = int_to_ptr.vmem [resolvable:$true] %s250
      %253 = dma.vmem_to_hbm [thread:$0]  %s251, 2048, %s3, [#allocation4]
    $region21: #{tpu_custom_call.1} parent=1 // pred_fallthru
      _
    // Predicated region
    $region22: #{tpu_custom_call.1} parent=1 // pred_check
      _
    $region23: #{tpu_custom_call.1} parent=1 // pred_check_branch
      %255 = sbr.rel (0) target = $region25
    $region24: #{tpu_custom_call.1} parent=1 // pred_region
      %256 = dma.done [#allocation4], 2048
    $region25: #{tpu_custom_call.1} parent=1 // pred_fallthru
      _
    %257 = vsyncpa [#allocation3], 1
    %258 = vsyncpa [#allocation4], 1

</llo_original>
